<compile_context>
chip_gen: v7x
topology: tpu7x:2x2x1
jax: 0.10.0
libtpu: 0.0.40
codegen_flags: <defaults>
</compile_context>

<pallas_src>
import functools

import jax
import jax.numpy as jnp
from jax import lax
from jax.experimental import pallas as pl
from jax.experimental.pallas import tpu as pltpu

LAMBDA_PARAM = 0.005


def _barlow_twins_kernel(za_ref, zb_ref, out_ref,
                         acc_ref, sa_ref, qa_ref, sb_ref, qb_ref,
                         *, n_total, lambda_param):
    i = pl.program_id(0)          # row tile of the (D, D) correlation matrix
    j = pl.program_id(1)          # col tile
    k = pl.program_id(2)          # batch (reduction) tile
    nk = pl.num_programs(2)

    @pl.when(k == 0)
    def _init():
        acc_ref[...] = jnp.zeros_like(acc_ref)
        sa_ref[...] = jnp.zeros_like(sa_ref)
        qa_ref[...] = jnp.zeros_like(qa_ref)
        sb_ref[...] = jnp.zeros_like(sb_ref)
        qb_ref[...] = jnp.zeros_like(qb_ref)

    za = za_ref[...]              # (TK, TD) tile of z_a, natural layout
    zb = zb_ref[...]              # (TK, TD) tile of z_b

    # Raw Gram on the MXU, contracting on dim 0 directly (no transpose).
    acc_ref[...] += lax.dot_general(
        za, zb,
        dimension_numbers=(((0,), (0,)), ((), ())),
        preferred_element_type=jnp.float32)

    # Running per-feature sums / sums of squares (f32 accumulation).
    za32 = za.astype(jnp.float32)
    zb32 = zb.astype(jnp.float32)
    ones_col = jnp.ones((za32.shape[0], 1), dtype=jnp.float32)
    # a-side stats as column vectors (TD, 1): skinny dim-0-contracting matmul.
    sa_ref[...] += lax.dot_general(
        za32, ones_col, dimension_numbers=(((0,), (0,)), ((), ())),
        preferred_element_type=jnp.float32)
    qa_ref[...] += lax.dot_general(
        za32 * za32, ones_col, dimension_numbers=(((0,), (0,)), ((), ())),
        preferred_element_type=jnp.float32)
    # b-side stats as row vectors (1, TD): sublane reduce.
    sb_ref[...] += jnp.sum(zb32, axis=0, keepdims=True)
    qb_ref[...] += jnp.sum(zb32 * zb32, axis=0, keepdims=True)

    @pl.when(k == nk - 1)
    def _finalize():
        n = jnp.float32(n_total)
        mu_a = sa_ref[...] / n                                  # (TD, 1)
        mu_b = sb_ref[...] / n                                  # (1, TD)
        # Unbiased variance (ddof=1), matching torch.std's default.
        var_a = (qa_ref[...] - n * mu_a * mu_a) / (n - 1.0)
        var_b = (qb_ref[...] - n * mu_b * mu_b) / (n - 1.0)
        inv_a = lax.rsqrt(var_a)                                # EUP, (TD, 1)
        inv_b = lax.rsqrt(var_b)                                # EUP, (1, TD)

        # Fused normalization: c = (G - N mu_a⊗mu_b) * (inv_a⊗inv_b) / N
        c = (acc_ref[...] - mu_a * (n * mu_b)) * (inv_a * (inv_b * (1.0 / n)))

        # Tile contribution: lambda*sum(c^2) plus diagonal correction on
        # diagonal tiles only (no D x D eye / weight materialization).
        tile_loss = lambda_param * jnp.sum(c * c)
        tm, tn = c.shape
        row = lax.broadcasted_iota(jnp.int32, (tm, tn), 0)
        col = lax.broadcasted_iota(jnp.int32, (tm, tn), 1)
        on_diag = (row == col) & (i == j)
        tile_loss += jnp.sum(
            jnp.where(on_diag, (c - 1.0) ** 2 - lambda_param * (c * c), 0.0))

        # Lane-dense (8, 128) partial-sum block: scalar at [0, 0], zeros
        # elsewhere; summed outside the kernel (no shared-scalar race across
        # parallel grid axes / TensorCores).
        orow = lax.broadcasted_iota(jnp.int32, out_ref.shape, 0)
        ocol = lax.broadcasted_iota(jnp.int32, out_ref.shape, 1)
        out_ref[...] = jnp.where((orow == 0) & (ocol == 0),
                                 tile_loss, jnp.float32(0.0))


def _pick_feature_tile(d, cap):
    """Largest multiple of 128 dividing d (<= cap); else the full dim."""
    best = None
    for t in range(128, min(d, cap) + 1, 128):
        if d % t == 0:
            best = t
    return best if best is not None else d


def _pick_batch_tile(n, cap):
    """Largest multiple of 8 dividing n (<= cap); else the full dim."""
    best = None
    for t in range(8, min(n, cap) + 1, 8):
        if n % t == 0:
            best = t
    return best if best is not None else n


def barlow_twins_loss(z_a: jax.Array, z_b: jax.Array,
                      lambda_param: float = LAMBDA_PARAM,
                      max_feature_tile: int = 256,
                      max_batch_tile: int = 512) -> jax.Array:
    """z_a, z_b: (N, D) arrays. Returns scalar float32 loss."""
    assert z_a.shape == z_b.shape and z_a.ndim == 2
    n, d = z_a.shape

    td = _pick_feature_tile(d, max_feature_tile)   # output tile (TM == TN)
    tk = _pick_batch_tile(n, max_batch_tile)       # batch reduction tile

    gi = d // td
    gj = d // td
    gk = n // tk

    kernel = functools.partial(
        _barlow_twins_kernel, n_total=n, lambda_param=float(lambda_param))

    partials = pl.pallas_call(
        kernel,
        out_shape=jax.ShapeDtypeStruct((gi * 8, gj * 128), jnp.float32),
        grid_spec=pltpu.PrefetchScalarGridSpec(
            num_scalar_prefetch=0,
            grid=(gi, gj, gk),
            in_specs=[
                pl.BlockSpec((tk, td), lambda i, j, k: (k, i)),   # z_a tile
                pl.BlockSpec((tk, td), lambda i, j, k: (k, j)),   # z_b tile
            ],
            out_specs=pl.BlockSpec((8, 128), lambda i, j, k: (i, j)),
            scratch_shapes=[
                pltpu.VMEM((td, td), jnp.float32),   # Gram accumulator
                pltpu.VMEM((td, 1), jnp.float32),    # sum z_a        (column)
                pltpu.VMEM((td, 1), jnp.float32),    # sum z_a^2      (column)
                pltpu.VMEM((1, td), jnp.float32),    # sum z_b        (row)
                pltpu.VMEM((1, td), jnp.float32),    # sum z_b^2      (row)
            ],
        ),
        compiler_params=pltpu.CompilerParams(
            dimension_semantics=("parallel", "parallel", "arbitrary")),
    )(z_a, z_b)

    return jnp.sum(partials)


def _reference(z_a, z_b, lambda_param=LAMBDA_PARAM):
    # Pure-JAX reference mirroring the PyTorch forward (for sanity check).
    z_a = z_a.astype(jnp.float32)
    z_b = z_b.astype(jnp.float32)
    n, d = z_a.shape
    za_n = (z_a - z_a.mean(0)) / z_a.std(0, ddof=1)
    zb_n = (z_b - z_b.mean(0)) / z_b.std(0, ddof=1)
    c = za_n.T @ zb_n / n
    eye = jnp.eye(d, dtype=jnp.float32)
    c_diff = (c - eye) ** 2
    weight = jnp.where(jnp.eye(d, dtype=bool), 1.0, lambda_param)
    return jnp.sum(c_diff * weight)


if __name__ == "__main__":
    key = jax.random.PRNGKey(0)
    k1, k2, k3, k4 = jax.random.split(key, 4)

    # Test 1: small shapes (single-tile grid).
    n1, d1 = 8, 32
    za1 = jax.random.normal(k1, (n1, d1), dtype=jnp.float32)
    zb1 = jax.random.normal(k2, (n1, d1), dtype=jnp.float32)
    loss1 = barlow_twins_loss(za1, zb1)
    jax.block_until_ready(loss1)
    ref1 = _reference(za1, zb1)
    assert jnp.allclose(loss1, ref1, rtol=1e-4, atol=1e-4), (loss1, ref1)

    # Test 2: force a multi-tile (i, j, k) grid to exercise the Gram
    # accumulator, the diagonal-tile correction and the partial-sum reduction.
    n2, d2 = 32, 256
    za2 = jax.random.normal(k3, (n2, d2), dtype=jnp.float32)
    zb2 = jax.random.normal(k4, (n2, d2), dtype=jnp.float32)
    loss2 = barlow_twins_loss(za2, zb2, max_feature_tile=128, max_batch_tile=8)
    jax.block_until_ready(loss2)
    ref2 = _reference(za2, zb2)
    assert jnp.allclose(loss2, ref2, rtol=1e-4, atol=1e-4), (loss2, ref2)

    print("KERNEL_OK")
</pallas_src>

<mosaic_0001>
module attributes {stable_mosaic.version = 11 : i64} {
  func.func @_barlow_twins_kernel(%arg0: i32, %arg1: i32, %arg2: i32, %arg3: memref<8x32xf32, #tpu.memory_space<vmem>>, %arg4: memref<8x32xf32, #tpu.memory_space<vmem>>, %arg5: memref<8x128xf32, #tpu.memory_space<vmem>>, %arg6: memref<32x32xf32, #tpu.memory_space<vmem>>, %arg7: memref<32x1xf32, #tpu.memory_space<vmem>>, %arg8: memref<32x1xf32, #tpu.memory_space<vmem>>, %arg9: memref<1x32xf32, #tpu.memory_space<vmem>>, %arg10: memref<1x32xf32, #tpu.memory_space<vmem>>) attributes {dimension_semantics = [#tpu.dimension_semantics<parallel>, #tpu.dimension_semantics<parallel>, #tpu.dimension_semantics<arbitrary>], iteration_bounds = array<i64: 1, 1, 1>, scalar_prefetch = 0 : i64, scratch_operands = 5 : i64, tpu.core_type = #tpu.core_type<tc>, window_params = [{transform_indices = @transform_0, window_bounds = array<i64: 8, 32>}, {transform_indices = @transform_1, window_bounds = array<i64: 8, 32>}, {transform_indices = @transform_2, window_bounds = array<i64: 8, 128>}]} {
    %c0_i32 = arith.constant 0 : i32
    %0 = arith.cmpi eq, %arg2, %c0_i32 : i32
    %1 = arith.extui %0 : i1 to i32
    %c0_i32_0 = arith.constant 0 : i32
    %2 = arith.cmpi ne, %1, %c0_i32_0 : i32
    scf.if %2 {
      %cst_31 = arith.constant 0.000000e+00 : f32
      %33 = vector.broadcast %cst_31 : f32 to vector<32x32xf32>
      %c0_32 = arith.constant 0 : index
      %c0_33 = arith.constant 0 : index
      %34 = vector.load %arg6[%c0_32, %c0_33] : memref<32x32xf32, #tpu.memory_space<vmem>>, vector<32x32xf32>
      tpu.vector_store %arg6[%c0_32, %c0_33], %33 {strides = array<i32>} : memref<32x32xf32, #tpu.memory_space<vmem>>, vector<32x32xf32>,
      %cst_34 = arith.constant 0.000000e+00 : f32
      %35 = vector.broadcast %cst_34 : f32 to vector<32x1xf32>
      %c0_35 = arith.constant 0 : index
      %c0_36 = arith.constant 0 : index
      %36 = vector.load %arg7[%c0_35, %c0_36] : memref<32x1xf32, #tpu.memory_space<vmem>>, vector<32x1xf32>
      tpu.vector_store %arg7[%c0_35, %c0_36], %35 {strides = array<i32>} : memref<32x1xf32, #tpu.memory_space<vmem>>, vector<32x1xf32>,
      %cst_37 = arith.constant 0.000000e+00 : f32
      %37 = vector.broadcast %cst_37 : f32 to vector<32x1xf32>
      %c0_38 = arith.constant 0 : index
      %c0_39 = arith.constant 0 : index
      %38 = vector.load %arg8[%c0_38, %c0_39] : memref<32x1xf32, #tpu.memory_space<vmem>>, vector<32x1xf32>
      tpu.vector_store %arg8[%c0_38, %c0_39], %37 {strides = array<i32>} : memref<32x1xf32, #tpu.memory_space<vmem>>, vector<32x1xf32>,
      %cst_40 = arith.constant 0.000000e+00 : f32
      %39 = vector.broadcast %cst_40 : f32 to vector<1x32xf32>
      %c0_41 = arith.constant 0 : index
      %c0_42 = arith.constant 0 : index
      %40 = vector.load %arg9[%c0_41, %c0_42] : memref<1x32xf32, #tpu.memory_space<vmem>>, vector<1x32xf32>
      tpu.vector_store %arg9[%c0_41, %c0_42], %39 {strides = array<i32>} : memref<1x32xf32, #tpu.memory_space<vmem>>, vector<1x32xf32>,
      %cst_43 = arith.constant 0.000000e+00 : f32
      %41 = vector.broadcast %cst_43 : f32 to vector<1x32xf32>
      %c0_44 = arith.constant 0 : index
      %c0_45 = arith.constant 0 : index
      %42 = vector.load %arg10[%c0_44, %c0_45] : memref<1x32xf32, #tpu.memory_space<vmem>>, vector<1x32xf32>
      tpu.vector_store %arg10[%c0_44, %c0_45], %41 {strides = array<i32>} : memref<1x32xf32, #tpu.memory_space<vmem>>, vector<1x32xf32>,
    } else {
    }
    %c0 = arith.constant 0 : index
    %c0_1 = arith.constant 0 : index
    %3 = vector.load %arg3[%c0, %c0_1] : memref<8x32xf32, #tpu.memory_space<vmem>>, vector<8x32xf32>
    %c0_2 = arith.constant 0 : index
    %c0_3 = arith.constant 0 : index
    %4 = vector.load %arg4[%c0_2, %c0_3] : memref<8x32xf32, #tpu.memory_space<vmem>>, vector<8x32xf32>
    %c0_4 = arith.constant 0 : index
    %c0_5 = arith.constant 0 : index
    %5 = vector.load %arg6[%c0_4, %c0_5] : memref<32x32xf32, #tpu.memory_space<vmem>>, vector<32x32xf32>
    %cst = arith.constant dense<0.000000e+00> : vector<32x32xf32>
    %6 = tpu.matmul %3, %4, %cst {dimension_numbers = #tpu.dot_dimension_numbers<[0], [0], [1], [1], [0, 1, 1, 1], [], []>} : vector<8x32xf32>, vector<8x32xf32>, vector<32x32xf32> -> vector<32x32xf32>
    %7 = arith.addf %5, %6 : vector<32x32xf32>
    %c0_6 = arith.constant 0 : index
    %c0_7 = arith.constant 0 : index
    %8 = vector.load %arg6[%c0_6, %c0_7] : memref<32x32xf32, #tpu.memory_space<vmem>>, vector<32x32xf32>
    tpu.vector_store %arg6[%c0_6, %c0_7], %7 {strides = array<i32>} : memref<32x32xf32, #tpu.memory_space<vmem>>, vector<32x32xf32>,
    %cst_8 = arith.constant 1.000000e+00 : f32
    %9 = vector.broadcast %cst_8 : f32 to vector<8x1xf32>
    %c0_9 = arith.constant 0 : index
    %c0_10 = arith.constant 0 : index
    %10 = vector.load %arg7[%c0_9, %c0_10] : memref<32x1xf32, #tpu.memory_space<vmem>>, vector<32x1xf32>
    %cst_11 = arith.constant dense<0.000000e+00> : vector<32x1xf32>
    %11 = tpu.matmul %3, %9, %cst_11 {dimension_numbers = #tpu.dot_dimension_numbers<[0], [0], [1], [1], [0, 1, 1, 1], [], []>} : vector<8x32xf32>, vector<8x1xf32>, vector<32x1xf32> -> vector<32x1xf32>
    %12 = arith.addf %10, %11 : vector<32x1xf32>
    %c0_12 = arith.constant 0 : index
    %c0_13 = arith.constant 0 : index
    %13 = vector.load %arg7[%c0_12, %c0_13] : memref<32x1xf32, #tpu.memory_space<vmem>>, vector<32x1xf32>
    tpu.vector_store %arg7[%c0_12, %c0_13], %12 {strides = array<i32>} : memref<32x1xf32, #tpu.memory_space<vmem>>, vector<32x1xf32>,
    %c0_14 = arith.constant 0 : index
    %c0_15 = arith.constant 0 : index
    %14 = vector.load %arg8[%c0_14, %c0_15] : memref<32x1xf32, #tpu.memory_space<vmem>>, vector<32x1xf32>
    %15 = arith.mulf %3, %3 : vector<8x32xf32>
    %cst_16 = arith.constant dense<0.000000e+00> : vector<32x1xf32>
    %16 = tpu.matmul %15, %9, %cst_16 {dimension_numbers = #tpu.dot_dimension_numbers<[0], [0], [1], [1], [0, 1, 1, 1], [], []>} : vector<8x32xf32>, vector<8x1xf32>, vector<32x1xf32> -> vector<32x1xf32>
    %17 = arith.addf %14, %16 : vector<32x1xf32>
    %c0_17 = arith.constant 0 : index
    %c0_18 = arith.constant 0 : index
    %18 = vector.load %arg8[%c0_17, %c0_18] : memref<32x1xf32, #tpu.memory_space<vmem>>, vector<32x1xf32>
    tpu.vector_store %arg8[%c0_17, %c0_18], %17 {strides = array<i32>} : memref<32x1xf32, #tpu.memory_space<vmem>>, vector<32x1xf32>,
    %c0_19 = arith.constant 0 : index
    %c0_20 = arith.constant 0 : index
    %19 = vector.load %arg9[%c0_19, %c0_20] : memref<1x32xf32, #tpu.memory_space<vmem>>, vector<1x32xf32>
    %cst_21 = arith.constant dense<0.000000e+00> : vector<32xf32>
    %20 = vector.multi_reduction <add>, %4, %cst_21 [0] : vector<8x32xf32> to vector<32xf32>
    %21 = vector.shape_cast %20 : vector<32xf32> to vector<1x32xf32>
    %22 = arith.addf %19, %21 : vector<1x32xf32>
    %c0_22 = arith.constant 0 : index
    %c0_23 = arith.constant 0 : index
    %23 = vector.load %arg9[%c0_22, %c0_23] : memref<1x32xf32, #tpu.memory_space<vmem>>, vector<1x32xf32>
    tpu.vector_store %arg9[%c0_22, %c0_23], %22 {strides = array<i32>} : memref<1x32xf32, #tpu.memory_space<vmem>>, vector<1x32xf32>,
    %c0_24 = arith.constant 0 : index
    %c0_25 = arith.constant 0 : index
    %24 = vector.load %arg10[%c0_24, %c0_25] : memref<1x32xf32, #tpu.memory_space<vmem>>, vector<1x32xf32>
    %25 = arith.mulf %4, %4 : vector<8x32xf32>
    %cst_26 = arith.constant dense<0.000000e+00> : vector<32xf32>
    %26 = vector.multi_reduction <add>, %25, %cst_26 [0] : vector<8x32xf32> to vector<32xf32>
    %27 = vector.shape_cast %26 : vector<32xf32> to vector<1x32xf32>
    %28 = arith.addf %24, %27 : vector<1x32xf32>
    %c0_27 = arith.constant 0 : index
    %c0_28 = arith.constant 0 : index
    %29 = vector.load %arg10[%c0_27, %c0_28] : memref<1x32xf32, #tpu.memory_space<vmem>>, vector<1x32xf32>
    tpu.vector_store %arg10[%c0_27, %c0_28], %28 {strides = array<i32>} : memref<1x32xf32, #tpu.memory_space<vmem>>, vector<1x32xf32>,
    %c0_i32_29 = arith.constant 0 : i32
    %30 = arith.cmpi eq, %arg2, %c0_i32_29 : i32
    %31 = arith.extui %30 : i1 to i32
    %c0_i32_30 = arith.constant 0 : i32
    %32 = arith.cmpi ne, %31, %c0_i32_30 : i32
    scf.if %32 {
      %c0_31 = arith.constant 0 : index
      %c0_32 = arith.constant 0 : index
      %33 = vector.load %arg7[%c0_31, %c0_32] : memref<32x1xf32, #tpu.memory_space<vmem>>, vector<32x1xf32>
      %cst_33 = arith.constant 8.000000e+00 : f32
      %34 = vector.broadcast %cst_33 : f32 to vector<32x1xf32>
      %35 = arith.divf %33, %34 : vector<32x1xf32>
      %c0_34 = arith.constant 0 : index
      %c0_35 = arith.constant 0 : index
      %36 = vector.load %arg9[%c0_34, %c0_35] : memref<1x32xf32, #tpu.memory_space<vmem>>, vector<1x32xf32>
      %cst_36 = arith.constant 8.000000e+00 : f32
      %37 = vector.broadcast %cst_36 : f32 to vector<1x32xf32>
      %38 = arith.divf %36, %37 : vector<1x32xf32>
      %c0_37 = arith.constant 0 : index
      %c0_38 = arith.constant 0 : index
      %39 = vector.load %arg8[%c0_37, %c0_38] : memref<32x1xf32, #tpu.memory_space<vmem>>, vector<32x1xf32>
      %cst_39 = arith.constant 8.000000e+00 : f32
      %40 = vector.broadcast %cst_39 : f32 to vector<32x1xf32>
      %41 = arith.mulf %40, %35 : vector<32x1xf32>
      %42 = arith.mulf %41, %35 : vector<32x1xf32>
      %43 = arith.subf %39, %42 : vector<32x1xf32>
      %cst_40 = arith.constant 8.000000e+00 : f32
      %cst_41 = arith.constant 1.000000e+00 : f32
      %44 = arith.subf %cst_40, %cst_41 : f32
      %45 = vector.broadcast %44 : f32 to vector<32x1xf32>
      %46 = arith.divf %43, %45 : vector<32x1xf32>
      %c0_42 = arith.constant 0 : index
      %c0_43 = arith.constant 0 : index
      %47 = vector.load %arg10[%c0_42, %c0_43] : memref<1x32xf32, #tpu.memory_space<vmem>>, vector<1x32xf32>
      %cst_44 = arith.constant 8.000000e+00 : f32
      %48 = vector.broadcast %cst_44 : f32 to vector<1x32xf32>
      %49 = arith.mulf %48, %38 : vector<1x32xf32>
      %50 = arith.mulf %49, %38 : vector<1x32xf32>
      %51 = arith.subf %47, %50 : vector<1x32xf32>
      %cst_45 = arith.constant 8.000000e+00 : f32
      %cst_46 = arith.constant 1.000000e+00 : f32
      %52 = arith.subf %cst_45, %cst_46 : f32
      %53 = vector.broadcast %52 : f32 to vector<1x32xf32>
      %54 = arith.divf %51, %53 : vector<1x32xf32>
      %55 = math.rsqrt %46 : vector<32x1xf32>
      %56 = math.rsqrt %54 : vector<1x32xf32>
      %c0_47 = arith.constant 0 : index
      %c0_48 = arith.constant 0 : index
      %57 = vector.load %arg6[%c0_47, %c0_48] : memref<32x32xf32, #tpu.memory_space<vmem>>, vector<32x32xf32>
      %cst_49 = arith.constant 8.000000e+00 : f32
      %58 = vector.broadcast %cst_49 : f32 to vector<1x32xf32>
      %59 = arith.mulf %58, %38 : vector<1x32xf32>
      %60 = vector.broadcast %35 : vector<32x1xf32> to vector<32x32xf32>
      %61 = vector.broadcast %59 : vector<1x32xf32> to vector<32x32xf32>
      %62 = arith.mulf %60, %61 : vector<32x32xf32>
      %63 = arith.subf %57, %62 : vector<32x32xf32>
      %cst_50 = arith.constant 1.000000e+00 : f32
      %cst_51 = arith.constant 8.000000e+00 : f32
      %64 = arith.divf %cst_50, %cst_51 : f32
      %65 = vector.broadcast %64 : f32 to vector<1x32xf32>
      %66 = arith.mulf %56, %65 : vector<1x32xf32>
      %67 = vector.broadcast %55 : vector<32x1xf32> to vector<32x32xf32>
      %68 = vector.broadcast %66 : vector<1x32xf32> to vector<32x32xf32>
      %69 = arith.mulf %67, %68 : vector<32x32xf32>
      %70 = arith.mulf %63, %69 : vector<32x32xf32>
      %71 = arith.mulf %70, %70 : vector<32x32xf32>
      %72 = vector.shape_cast %71 : vector<32x32xf32> to vector<1x32x32xf32>
      %cst_52 = arith.constant dense<0.000000e+00> : vector<1xf32>
      %73 = vector.multi_reduction <add>, %72, %cst_52 [1, 2] : vector<1x32x32xf32> to vector<1xf32>
      %74 = vector.shape_cast %73 : vector<1xf32> to vector<1x1x1xf32>
      %75 = vector.extract %74[0, 0, 0] : f32 from vector<1x1x1xf32>
      %cst_53 = arith.constant 5.000000e-03 : f32
      %76 = arith.mulf %cst_53, %75 : f32
      %77 = tpu.iota {dimensions = array<i32: 0>} : vector<32x32xi32>
      %78 = tpu.iota {dimensions = array<i32: 1>} : vector<32x32xi32>
      %79 = arith.cmpi eq, %77, %78 : vector<32x32xi32>
      %80 = arith.cmpi eq, %arg0, %arg1 : i32
      %81 = vector.broadcast %80 : i1 to vector<32x32xi1>
      %82 = arith.andi %79, %81 : vector<32x32xi1>
      %cst_54 = arith.constant 1.000000e+00 : f32
      %83 = vector.broadcast %cst_54 : f32 to vector<32x32xf32>
      %84 = arith.subf %70, %83 : vector<32x32xf32>
      %85 = arith.mulf %84, %84 : vector<32x32xf32>
      %86 = arith.mulf %70, %70 : vector<32x32xf32>
      %cst_55 = arith.constant 5.000000e-03 : f32
      %87 = vector.broadcast %cst_55 : f32 to vector<32x32xf32>
      %88 = arith.mulf %87, %86 : vector<32x32xf32>
      %89 = arith.subf %85, %88 : vector<32x32xf32>
      %cst_56 = arith.constant 0.000000e+00 : f32
      %90 = vector.broadcast %cst_56 : f32 to vector<32x32xf32>
      %91 = arith.select %82, %89, %90 : vector<32x32xi1>, vector<32x32xf32>
      %92 = vector.shape_cast %91 : vector<32x32xf32> to vector<1x32x32xf32>
      %cst_57 = arith.constant dense<0.000000e+00> : vector<1xf32>
      %93 = vector.multi_reduction <add>, %92, %cst_57 [1, 2] : vector<1x32x32xf32> to vector<1xf32>
      %94 = vector.shape_cast %93 : vector<1xf32> to vector<1x1x1xf32>
      %95 = vector.extract %94[0, 0, 0] : f32 from vector<1x1x1xf32>
      %96 = arith.addf %76, %95 : f32
      %97 = tpu.iota {dimensions = array<i32: 0>} : vector<8x128xi32>
      %98 = tpu.iota {dimensions = array<i32: 1>} : vector<8x128xi32>
      %c0_i32_58 = arith.constant 0 : i32
      %99 = vector.broadcast %c0_i32_58 : i32 to vector<8x128xi32>
      %100 = arith.cmpi eq, %97, %99 : vector<8x128xi32>
      %c0_i32_59 = arith.constant 0 : i32
      %101 = vector.broadcast %c0_i32_59 : i32 to vector<8x128xi32>
      %102 = arith.cmpi eq, %98, %101 : vector<8x128xi32>
      %103 = arith.andi %100, %102 : vector<8x128xi1>
      %cst_60 = arith.constant 0.000000e+00 : f32
      %104 = vector.broadcast %96 : f32 to vector<8x128xf32>
      %105 = vector.broadcast %cst_60 : f32 to vector<8x128xf32>
      %106 = arith.select %103, %104, %105 : vector<8x128xi1>, vector<8x128xf32>
      %c0_61 = arith.constant 0 : index
      %c0_62 = arith.constant 0 : index
      %107 = vector.load %arg5[%c0_61, %c0_62] : memref<8x128xf32, #tpu.memory_space<vmem>>, vector<8x128xf32>
      tpu.vector_store %arg5[%c0_61, %c0_62], %106 {strides = array<i32>} : memref<8x128xf32, #tpu.memory_space<vmem>>, vector<8x128xf32>,
    } else {
    }
    return
  }
  func.func @transform_0(%arg0: i32, %arg1: i32, %arg2: i32) -> (i32, i32) {
    %c0_i32 = arith.constant 0 : i32
    return %arg2, %arg0 : i32, i32
  }
  func.func @transform_1(%arg0: i32, %arg1: i32, %arg2: i32) -> (i32, i32) {
    %c0_i32 = arith.constant 0 : i32
    return %arg2, %arg1 : i32, i32
  }
  func.func @transform_2(%arg0: i32, %arg1: i32, %arg2: i32) -> (i32, i32) {
    %c0_i32 = arith.constant 0 : i32
    return %arg0, %arg1 : i32, i32
  }
}

</mosaic_0001>

<llo_original>
// kernel: tpu_custom_call.1
$region0: #{tpu_custom_call.1}
  #allocation0 [shape = 'u32[]', space=smem, size = 0x4, offset = 0x4, fixed_abs, tag = 'smem constant byte address 0x4 - core index']
  #allocation1 [shape = 'u32[144,128]{1,0:T(1,128)}', space=vmem, size = 0x12000, scoped, tag = 'internal scratch']
  #allocation2 [shape = 'f32[32,32]{1,0:T(8,128)}', space=vmem, size = 0x4000, scoped, tag = 'scratch operand']
  #allocation3 [shape = 'f32[32,1]{1,0:T(8,128)}', space=vmem, size = 0x4000, scoped, tag = 'scratch operand']
  #allocation4 [shape = 'f32[32,1]{1,0:T(8,128)}', space=vmem, size = 0x4000, scoped, tag = 'scratch operand']
  #allocation5 [shape = 'f32[1,32]{1,0:T(1,128)}', space=vmem, size = 0x200, scoped, tag = 'scratch operand']
  #allocation6 [shape = 'f32[1,32]{1,0:T(1,128)}', space=vmem, size = 0x200, scoped, tag = 'scratch operand']
  %s0 = inlined_call_operand.hbm [shape: f32[8,32], index: 0, kind: input, shape index: {}]
  %s1 = inlined_call_operand.hbm [shape: f32[8,32], index: 1, kind: input, shape index: {}]
  %s2 = inlined_call_operand.hbm [shape: f32[8,128], index: 2, kind: output, shape index: {}]
  %s3 = sld [smem:[#allocation0]]
  $region34: #{tpu_custom_call.1} parent=0
    _
  %s5 = ssub.s32 1, %s3
  %s6 = scalar_select 0, %s5, %s3
  $region1: #{tpu_custom_call.1} parent=0
    #allocation7 [shape = 'u8[4096]{0}', space=vmem, size = 0x1000, scoped, tag = 'input window, operand 0, single buffered']
    #allocation8 [shape = 's32[1]{0}', space=sflag, size = 0x4, scoped, tag = 'scoped memory for tpu_custom_call.1']
    #allocation9 [shape = 's32[1]{0}', space=sflag, size = 0x4, scoped, tag = 'scoped memory for tpu_custom_call.1']
    #allocation10 [shape = 'u8[4096]{0}', space=vmem, size = 0x1000, scoped, tag = 'input window, operand 1, single buffered']
    #allocation11 [shape = 's32[1]{0}', space=sflag, size = 0x4, scoped, tag = 'scoped memory for tpu_custom_call.1']
    #allocation12 [shape = 'u8[4096]{0}', space=vmem, size = 0x1000, scoped, tag = 'output window, operand 0, single buffered']
    %7 = vsyncpa [#allocation8], 0
    %8 = vsyncpa [#allocation11], 0
    %9 = vsyncpa [#allocation9], 0
    // Predicated region
    $region2: #{tpu_custom_call.1} parent=1 // pred_check
      _
    $region3: #{tpu_custom_call.1} parent=1 // pred_check_branch
      %11 = sbr.rel (0) target = $region5
    $region4: #{tpu_custom_call.1} parent=1 // pred_region
      %s13 = ssub.s32 128, 128
      %14 = vsyncadd [#allocation8], %s13
      %s16 = sshll.u32 [#allocation7], 4
      %s17 = int_to_ptr.vmem [resolvable:$true] %s16
      %19 = dma.hbm_to_vmem [thread:$0]  %s0, 128, %s17, [#allocation8]
    $region5: #{tpu_custom_call.1} parent=1 // pred_fallthru
      _
    // Predicated region
    $region6: #{tpu_custom_call.1} parent=1 // pred_check
      _
    $region7: #{tpu_custom_call.1} parent=1 // pred_check_branch
      %21 = sbr.rel (0) target = $region9
    $region8: #{tpu_custom_call.1} parent=1 // pred_region
      %s23 = ssub.s32 128, 128
      %24 = vsyncadd [#allocation11], %s23
      %s26 = sshll.u32 [#allocation10], 4
      %s27 = int_to_ptr.vmem [resolvable:$true] %s26
      %29 = dma.hbm_to_vmem [thread:$0]  %s1, 128, %s27, [#allocation11]
    $region9: #{tpu_custom_call.1} parent=1 // pred_fallthru
      _
    // Predicated region
    $region10: #{tpu_custom_call.1} parent=1 // pred_check
      _
    $region11: #{tpu_custom_call.1} parent=1 // pred_check_branch
      %31 = sbr.rel (0) target = $region13
    $region12: #{tpu_custom_call.1} parent=1 // pred_region
      %32 = dma.done [#allocation8], 128
    $region13: #{tpu_custom_call.1} parent=1 // pred_fallthru
      _
    // Predicated region
    $region14: #{tpu_custom_call.1} parent=1 // pred_check
      _
    $region15: #{tpu_custom_call.1} parent=1 // pred_check_branch
      %34 = sbr.rel (0) target = $region17
    $region16: #{tpu_custom_call.1} parent=1 // pred_region
      %35 = dma.done [#allocation11], 128
    $region17: #{tpu_custom_call.1} parent=1 // pred_fallthru
      _
    %p36 = scmp.eq.s32.totalorder 0, 0
    // Predicated region
    $region18: #{tpu_custom_call.1} parent=1 // pred_check
      %p37 = pneg %p36
    $region19: #{tpu_custom_call.1} parent=1 // pred_check_branch
      %39 = sbr.rel (%p37) target = $region21
    $region20: #{tpu_custom_call.1} parent=1 // pred_region
      %vm40 = vcmask 261120
      %41 = vst.msk [vmem:[#allocation2] sm:$0xff] %vm40, 0.0
      %42 = vst.msk [vmem:[#allocation2 + $0x8] sm:$0xff] %vm40, 0.0
      %43 = vst.msk [vmem:[#allocation2 + $0x10] sm:$0xff] %vm40, 0.0
      %44 = vst.msk [vmem:[#allocation2 + $0x18] sm:$0xff] %vm40, 0.0
      %vm45 = vcmask 7168
      %46 = vst.msk [vmem:[#allocation3] sm:$0xff] %vm45, 0.0
      %47 = vst.msk [vmem:[#allocation3 + $0x8] sm:$0xff] %vm45, 0.0
      %48 = vst.msk [vmem:[#allocation3 + $0x10] sm:$0xff] %vm45, 0.0
      %49 = vst.msk [vmem:[#allocation3 + $0x18] sm:$0xff] %vm45, 0.0
      %50 = vst.msk [vmem:[#allocation4] sm:$0xff] %vm45, 0.0
      %51 = vst.msk [vmem:[#allocation4 + $0x8] sm:$0xff] %vm45, 0.0
      %52 = vst.msk [vmem:[#allocation4 + $0x10] sm:$0xff] %vm45, 0.0
      %53 = vst.msk [vmem:[#allocation4 + $0x18] sm:$0xff] %vm45, 0.0
      %vm54 = vcmask 253952
      %55 = vst.msk [vmem:[#allocation5] sm:$0x1] %vm54, 0.0
      %56 = vst.msk [vmem:[#allocation6] sm:$0x1] %vm54, 0.0
    $region21: #{tpu_custom_call.1} parent=1 // pred_fallthru
      _
    %v57 = vld [vmem:[#allocation7] sm:$0xff]
    %v58 = vld [vmem:[#allocation10] sm:$0xff]
    %v59 = vld [vmem:[#allocation2] sm:$0xff]
    %v60 = vld [vmem:[#allocation2 + $0x8] sm:$0xff]
    %v61 = vld [vmem:[#allocation2 + $0x10] sm:$0xff]
    %v62 = vld [vmem:[#allocation2 + $0x18] sm:$0xff]
    %63 = vxpose.xlu0.b32.start [1/16] %v57, 128
    %64 = vxpose.xlu0.b32.cont [2/16] 0.0, 128
    %65 = vxpose.xlu0.b32.cont [3/16] 0.0, 128
    %66 = vxpose.xlu0.b32.cont [4/16] 0.0, 128
    %67 = vxpose.xlu0.b32.cont [5/16] 0.0, 128
    %68 = vxpose.xlu0.b32.cont [6/16] 0.0, 128
    %69 = vxpose.xlu0.b32.cont [7/16] 0.0, 128
    %70 = vxpose.xlu0.b32.cont [8/16] 0.0, 128
    %71 = vxpose.xlu0.b32.cont [9/16] 0.0, 128
    %72 = vxpose.xlu0.b32.cont [10/16] 0.0, 128
    %73 = vxpose.xlu0.b32.cont [11/16] 0.0, 128
    %74 = vxpose.xlu0.b32.cont [12/16] 0.0, 128
    %75 = vxpose.xlu0.b32.cont [13/16] 0.0, 128
    %76 = vxpose.xlu0.b32.cont [14/16] 0.0, 128
    %77 = vxpose.xlu0.b32.cont [15/16] 0.0, 128
    %78 = vxpose.xlu0.b32.end [16/16] 0.0, 128
    %v79 = vpop.trf.xlu0
    %v80 = vpop.trf.xlu0
    %v81 = vpop.trf.xlu0
    %v82 = vpop.trf.xlu0
    %v83 = vpop.trf.xlu0
    %v84 = vpop.trf.xlu0
    %v85 = vpop.trf.xlu0
    %v86 = vpop.trf.xlu0
    %v87 = vpop.trf.xlu0
    %v88 = vpop.trf.xlu0
    %v89 = vpop.trf.xlu0
    %v90 = vpop.trf.xlu0
    %v91 = vpop.trf.xlu0
    %v92 = vpop.trf.xlu0
    %v93 = vpop.trf.xlu0
    %v94 = vpop.trf.xlu0
    %vm95 = vcmask 64512
    %v97 = vsel %vm95, %v79, 0
    %v100 = vsel %vm95, %v80, 0
    %v103 = vsel %vm95, %v81, 0
    %v106 = vsel %vm95, %v82, 0
    %108 = vmatprep.subr.mxu0 0.0
    %109 = vmatpush1.msra.mxu0 %v58
    %110 = vmatprep.subr.mxu0 0.0
    %111 = vmatpush1.msra.mxu0 0.0
    %112 = vmatprep.subr.mxu0 0.0
    %113 = vmatpush1.msra.mxu0 0.0
    %114 = vmatprep.subr.mxu0 0.0
    %115 = vmatpush1.msra.mxu0 0.0
    %116 = vmatprep.subr.mxu0 0.0
    %117 = vmatpush1.msra.mxu0 0.0
    %118 = vmatprep.subr.mxu0 0.0
    %119 = vmatpush1.msra.mxu0 0.0
    %120 = vmatprep.subr.mxu0 0.0
    %121 = vmatpush1.msra.mxu0 0.0
    %122 = vmatprep.subr.mxu0 0.0
    %123 = vmatpush1.msra.mxu0 0.0
    %124 = vmatprep.subr.mxu0 0.0
    %125 = vmatpush1.msra.mxu0 0.0
    %126 = vmatprep.subr.mxu0 0.0
    %127 = vmatpush1.msra.mxu0 0.0
    %128 = vmatprep.subr.mxu0 0.0
    %129 = vmatpush1.msra.mxu0 0.0
    %130 = vmatprep.subr.mxu0 0.0
    %131 = vmatpush1.msra.mxu0 0.0
    %132 = vmatprep.subr.mxu0 0.0
    %133 = vmatpush1.msra.mxu0 0.0
    %134 = vmatprep.subr.mxu0 0.0
    %135 = vmatpush1.msra.mxu0 0.0
    %136 = vmatprep.subr.mxu0 0.0
    %137 = vmatpush1.msra.mxu0 0.0
    %138 = vmatprep.subr.mxu0 0.0
    %139 = vmatpush1.msra.mxu0 0.0
    %140 = vmatprep.subr.mxu0 0.0
    %141 = vmatpush1.msra.mxu0 0.0
    %142 = vmatprep.subr.mxu0 0.0
    %143 = vmatpush1.msra.mxu0 0.0
    %144 = vmatprep.subr.mxu0 0.0
    %145 = vmatpush1.msra.mxu0 0.0
    %146 = vmatprep.subr.mxu0 0.0
    %147 = vmatpush1.msra.mxu0 0.0
    %148 = vmatprep.subr.mxu0 0.0
    %149 = vmatpush1.msra.mxu0 0.0
    %150 = vmatprep.subr.mxu0 0.0
    %151 = vmatpush1.msra.mxu0 0.0
    %152 = vmatprep.subr.mxu0 0.0
    %153 = vmatpush1.msra.mxu0 0.0
    %154 = vmatprep.subr.mxu0 0.0
    %155 = vmatpush1.msra.mxu0 0.0
    %156 = vmatprep.subr.mxu0 0.0
    %157 = vmatpush1.msra.mxu0 0.0
    %158 = vmatprep.subr.mxu0 0.0
    %159 = vmatpush1.msra.mxu0 0.0
    %160 = vmatprep.subr.mxu0 0.0
    %161 = vmatpush1.msra.mxu0 0.0
    %162 = vmatprep.subr.mxu0 0.0
    %163 = vmatpush1.msra.mxu0 0.0
    %164 = vmatprep.subr.mxu0 0.0
    %165 = vmatpush1.msra.mxu0 0.0
    %166 = vmatprep.subr.mxu0 0.0
    %167 = vmatpush1.msra.mxu0 0.0
    %168 = vmatprep.subr.mxu0 0.0
    %169 = vmatpush1.msra.mxu0 0.0
    %170 = vmatprep.subr.mxu0 0.0
    %171 = vmatpush1.msra.mxu0 0.0
    %172 = vmatprep.mubr.f32.mxu0 0.0
    %173 = vmatmul.mubr.f32.gmra.mrb[0].mxu0 %v97
    %v174 = vpop.f32.mrb[0].mxu0
    %v175 = vadd.f32 0.0, %v174
    %v176 = vpop.f32.mrb[0].mxu0
    %177 = vmatprep.mubr.f32.mxu0 0.0
    %178 = vmatmul.mubr.f32.gmra.mrb[0].mxu0 %v100
    %v179 = vpop.f32.mrb[0].mxu0
    %v180 = vadd.f32 0.0, %v179
    %v181 = vpop.f32.mrb[0].mxu0
    %182 = vmatprep.mubr.f32.mxu0 0.0
    %183 = vmatmul.mubr.f32.gmra.mrb[0].mxu0 %v103
    %v184 = vpop.f32.mrb[0].mxu0
    %v185 = vadd.f32 0.0, %v184
    %v186 = vpop.f32.mrb[0].mxu0
    %187 = vmatprep.mubr.f32.mxu0 0.0
    %188 = vmatmul.mubr.f32.gmra.mrb[0].mxu0 %v106
    %v189 = vpop.f32.mrb[0].mxu0
    %v190 = vadd.f32 0.0, %v189
    %v191 = vpop.f32.mrb[0].mxu0
    %192 = vdwg.mxu0
    %v193 = vadd.f32 %v59, %v175
    %v194 = vadd.f32 %v60, %v180
    %v195 = vadd.f32 %v61, %v185
    %v196 = vadd.f32 %v62, %v190
    %vm197 = vcmask 261120
    %198 = vst.msk [vmem:[#allocation2] sm:$0xff] %vm197, %v193
    %199 = vst.msk [vmem:[#allocation2 + $0x8] sm:$0xff] %vm197, %v194
    %200 = vst.msk [vmem:[#allocation2 + $0x10] sm:$0xff] %vm197, %v195
    %201 = vst.msk [vmem:[#allocation2 + $0x18] sm:$0xff] %vm197, %v196
    %v202 = vld [vmem:[#allocation3] sm:$0xff]
    %v203 = vld [vmem:[#allocation3 + $0x8] sm:$0xff]
    %v204 = vld [vmem:[#allocation3 + $0x10] sm:$0xff]
    %v205 = vld [vmem:[#allocation3 + $0x18] sm:$0xff]
    %206 = vmatprep.subr.mxu0 0.0
    %207 = vmatpush1.msra.mxu0 1.0
    %208 = vmatprep.subr.mxu0 0.0
    %209 = vmatpush1.msra.mxu0 0.0
    %210 = vmatprep.subr.mxu0 0.0
    %211 = vmatpush1.msra.mxu0 0.0
    %212 = vmatprep.subr.mxu0 0.0
    %213 = vmatpush1.msra.mxu0 0.0
    %214 = vmatprep.subr.mxu0 0.0
    %215 = vmatpush1.msra.mxu0 0.0
    %216 = vmatprep.subr.mxu0 0.0
    %217 = vmatpush1.msra.mxu0 0.0
    %218 = vmatprep.subr.mxu0 0.0
    %219 = vmatpush1.msra.mxu0 0.0
    %220 = vmatprep.subr.mxu0 0.0
    %221 = vmatpush1.msra.mxu0 0.0
    %222 = vmatprep.subr.mxu0 0.0
    %223 = vmatpush1.msra.mxu0 0.0
    %224 = vmatprep.subr.mxu0 0.0
    %225 = vmatpush1.msra.mxu0 0.0
    %226 = vmatprep.subr.mxu0 0.0
    %227 = vmatpush1.msra.mxu0 0.0
    %228 = vmatprep.subr.mxu0 0.0
    %229 = vmatpush1.msra.mxu0 0.0
    %230 = vmatprep.subr.mxu0 0.0
    %231 = vmatpush1.msra.mxu0 0.0
    %232 = vmatprep.subr.mxu0 0.0
    %233 = vmatpush1.msra.mxu0 0.0
    %234 = vmatprep.subr.mxu0 0.0
    %235 = vmatpush1.msra.mxu0 0.0
    %236 = vmatprep.subr.mxu0 0.0
    %237 = vmatpush1.msra.mxu0 0.0
    %238 = vmatprep.subr.mxu0 0.0
    %239 = vmatpush1.msra.mxu0 0.0
    %240 = vmatprep.subr.mxu0 0.0
    %241 = vmatpush1.msra.mxu0 0.0
    %242 = vmatprep.subr.mxu0 0.0
    %243 = vmatpush1.msra.mxu0 0.0
    %244 = vmatprep.subr.mxu0 0.0
    %245 = vmatpush1.msra.mxu0 0.0
    %246 = vmatprep.subr.mxu0 0.0
    %247 = vmatpush1.msra.mxu0 0.0
    %248 = vmatprep.subr.mxu0 0.0
    %249 = vmatpush1.msra.mxu0 0.0
    %250 = vmatprep.subr.mxu0 0.0
    %251 = vmatpush1.msra.mxu0 0.0
    %252 = vmatprep.subr.mxu0 0.0
    %253 = vmatpush1.msra.mxu0 0.0
    %254 = vmatprep.subr.mxu0 0.0
    %255 = vmatpush1.msra.mxu0 0.0
    %256 = vmatprep.subr.mxu0 0.0
    %257 = vmatpush1.msra.mxu0 0.0
    %258 = vmatprep.subr.mxu0 0.0
    %259 = vmatpush1.msra.mxu0 0.0
    %260 = vmatprep.subr.mxu0 0.0
    %261 = vmatpush1.msra.mxu0 0.0
    %262 = vmatprep.subr.mxu0 0.0
    %263 = vmatpush1.msra.mxu0 0.0
    %264 = vmatprep.subr.mxu0 0.0
    %265 = vmatpush1.msra.mxu0 0.0
    %266 = vmatprep.subr.mxu0 0.0
    %267 = vmatpush1.msra.mxu0 0.0
    %268 = vmatprep.subr.mxu0 0.0
    %269 = vmatpush1.msra.mxu0 0.0
    %270 = vmatprep.mubr.f32.mxu0 0.0
    %271 = vmatmul.mubr.f32.gmra.mrb[0].mxu0 %v97
    %v272 = vpop.f32.mrb[0].mxu0
    %v273 = vadd.f32 0.0, %v272
    %v274 = vpop.f32.mrb[0].mxu0
    %275 = vmatprep.mubr.f32.mxu0 0.0
    %276 = vmatmul.mubr.f32.gmra.mrb[0].mxu0 %v100
    %v277 = vpop.f32.mrb[0].mxu0
    %v278 = vadd.f32 0.0, %v277
    %v279 = vpop.f32.mrb[0].mxu0
    %280 = vmatprep.mubr.f32.mxu0 0.0
    %281 = vmatmul.mubr.f32.gmra.mrb[0].mxu0 %v103
    %v282 = vpop.f32.mrb[0].mxu0
    %v283 = vadd.f32 0.0, %v282
    %v284 = vpop.f32.mrb[0].mxu0
    %285 = vmatprep.mubr.f32.mxu0 0.0
    %286 = vmatmul.mubr.f32.gmra.mrb[0].mxu0 %v106
    %v287 = vpop.f32.mrb[0].mxu0
    %v288 = vadd.f32 0.0, %v287
    %v289 = vpop.f32.mrb[0].mxu0
    %290 = vdwg.mxu0
    %v291 = vadd.f32 %v202, %v273
    %v292 = vadd.f32 %v203, %v278
    %v293 = vadd.f32 %v204, %v283
    %v294 = vadd.f32 %v205, %v288
    %vm295 = vcmask 7168
    %296 = vst.msk [vmem:[#allocation3] sm:$0xff] %vm295, %v291
    %297 = vst.msk [vmem:[#allocation3 + $0x8] sm:$0xff] %vm295, %v292
    %298 = vst.msk [vmem:[#allocation3 + $0x10] sm:$0xff] %vm295, %v293
    %299 = vst.msk [vmem:[#allocation3 + $0x18] sm:$0xff] %vm295, %v294
    %v300 = vld [vmem:[#allocation4] sm:$0xff]
    %v301 = vld [vmem:[#allocation4 + $0x8] sm:$0xff]
    %v302 = vld [vmem:[#allocation4 + $0x10] sm:$0xff]
    %v303 = vld [vmem:[#allocation4 + $0x18] sm:$0xff]
    %v304 = vmul.f32 %v57, %v57
    %305 = vxpose.xlu0.b32.start [1/16] %v304, 128
    %306 = vxpose.xlu0.b32.cont [2/16] 0.0, 128
    %307 = vxpose.xlu0.b32.cont [3/16] 0.0, 128
    %308 = vxpose.xlu0.b32.cont [4/16] 0.0, 128
    %309 = vxpose.xlu0.b32.cont [5/16] 0.0, 128
    %310 = vxpose.xlu0.b32.cont [6/16] 0.0, 128
    %311 = vxpose.xlu0.b32.cont [7/16] 0.0, 128
    %312 = vxpose.xlu0.b32.cont [8/16] 0.0, 128
    %313 = vxpose.xlu0.b32.cont [9/16] 0.0, 128
    %314 = vxpose.xlu0.b32.cont [10/16] 0.0, 128
    %315 = vxpose.xlu0.b32.cont [11/16] 0.0, 128
    %316 = vxpose.xlu0.b32.cont [12/16] 0.0, 128
    %317 = vxpose.xlu0.b32.cont [13/16] 0.0, 128
    %318 = vxpose.xlu0.b32.cont [14/16] 0.0, 128
    %319 = vxpose.xlu0.b32.cont [15/16] 0.0, 128
    %320 = vxpose.xlu0.b32.end [16/16] 0.0, 128
    %v321 = vpop.trf.xlu0
    %v322 = vpop.trf.xlu0
    %v323 = vpop.trf.xlu0
    %v324 = vpop.trf.xlu0
    %v325 = vpop.trf.xlu0
    %v326 = vpop.trf.xlu0
    %v327 = vpop.trf.xlu0
    %v328 = vpop.trf.xlu0
    %v329 = vpop.trf.xlu0
    %v330 = vpop.trf.xlu0
    %v331 = vpop.trf.xlu0
    %v332 = vpop.trf.xlu0
    %v333 = vpop.trf.xlu0
    %v334 = vpop.trf.xlu0
    %v335 = vpop.trf.xlu0
    %v336 = vpop.trf.xlu0
    %v338 = vsel %vm95, %v321, 0
    %v341 = vsel %vm95, %v322, 0
    %v344 = vsel %vm95, %v323, 0
    %v347 = vsel %vm95, %v324, 0
    %349 = vmatprep.subr.mxu0 0.0
    %350 = vmatpush1.msra.mxu0 1.0
    %351 = vmatprep.subr.mxu0 0.0
    %352 = vmatpush1.msra.mxu0 0.0
    %353 = vmatprep.subr.mxu0 0.0
    %354 = vmatpush1.msra.mxu0 0.0
    %355 = vmatprep.subr.mxu0 0.0
    %356 = vmatpush1.msra.mxu0 0.0
    %357 = vmatprep.subr.mxu0 0.0
    %358 = vmatpush1.msra.mxu0 0.0
    %359 = vmatprep.subr.mxu0 0.0
    %360 = vmatpush1.msra.mxu0 0.0
    %361 = vmatprep.subr.mxu0 0.0
    %362 = vmatpush1.msra.mxu0 0.0
    %363 = vmatprep.subr.mxu0 0.0
    %364 = vmatpush1.msra.mxu0 0.0
    %365 = vmatprep.subr.mxu0 0.0
    %366 = vmatpush1.msra.mxu0 0.0
    %367 = vmatprep.subr.mxu0 0.0
    %368 = vmatpush1.msra.mxu0 0.0
    %369 = vmatprep.subr.mxu0 0.0
    %370 = vmatpush1.msra.mxu0 0.0
    %371 = vmatprep.subr.mxu0 0.0
    %372 = vmatpush1.msra.mxu0 0.0
    %373 = vmatprep.subr.mxu0 0.0
    %374 = vmatpush1.msra.mxu0 0.0
    %375 = vmatprep.subr.mxu0 0.0
    %376 = vmatpush1.msra.mxu0 0.0
    %377 = vmatprep.subr.mxu0 0.0
    %378 = vmatpush1.msra.mxu0 0.0
    %379 = vmatprep.subr.mxu0 0.0
    %380 = vmatpush1.msra.mxu0 0.0
    %381 = vmatprep.subr.mxu0 0.0
    %382 = vmatpush1.msra.mxu0 0.0
    %383 = vmatprep.subr.mxu0 0.0
    %384 = vmatpush1.msra.mxu0 0.0
    %385 = vmatprep.subr.mxu0 0.0
    %386 = vmatpush1.msra.mxu0 0.0
    %387 = vmatprep.subr.mxu0 0.0
    %388 = vmatpush1.msra.mxu0 0.0
    %389 = vmatprep.subr.mxu0 0.0
    %390 = vmatpush1.msra.mxu0 0.0
    %391 = vmatprep.subr.mxu0 0.0
    %392 = vmatpush1.msra.mxu0 0.0
    %393 = vmatprep.subr.mxu0 0.0
    %394 = vmatpush1.msra.mxu0 0.0
    %395 = vmatprep.subr.mxu0 0.0
    %396 = vmatpush1.msra.mxu0 0.0
    %397 = vmatprep.subr.mxu0 0.0
    %398 = vmatpush1.msra.mxu0 0.0
    %399 = vmatprep.subr.mxu0 0.0
    %400 = vmatpush1.msra.mxu0 0.0
    %401 = vmatprep.subr.mxu0 0.0
    %402 = vmatpush1.msra.mxu0 0.0
    %403 = vmatprep.subr.mxu0 0.0
    %404 = vmatpush1.msra.mxu0 0.0
    %405 = vmatprep.subr.mxu0 0.0
    %406 = vmatpush1.msra.mxu0 0.0
    %407 = vmatprep.subr.mxu0 0.0
    %408 = vmatpush1.msra.mxu0 0.0
    %409 = vmatprep.subr.mxu0 0.0
    %410 = vmatpush1.msra.mxu0 0.0
    %411 = vmatprep.subr.mxu0 0.0
    %412 = vmatpush1.msra.mxu0 0.0
    %413 = vmatprep.mubr.f32.mxu0 0.0
    %414 = vmatmul.mubr.f32.gmra.mrb[0].mxu0 %v338
    %v415 = vpop.f32.mrb[0].mxu0
    %v416 = vadd.f32 0.0, %v415
    %v417 = vpop.f32.mrb[0].mxu0
    %418 = vmatprep.mubr.f32.mxu0 0.0
    %419 = vmatmul.mubr.f32.gmra.mrb[0].mxu0 %v341
    %v420 = vpop.f32.mrb[0].mxu0
    %v421 = vadd.f32 0.0, %v420
    %v422 = vpop.f32.mrb[0].mxu0
    %423 = vmatprep.mubr.f32.mxu0 0.0
    %424 = vmatmul.mubr.f32.gmra.mrb[0].mxu0 %v344
    %v425 = vpop.f32.mrb[0].mxu0
    %v426 = vadd.f32 0.0, %v425
    %v427 = vpop.f32.mrb[0].mxu0
    %428 = vmatprep.mubr.f32.mxu0 0.0
    %429 = vmatmul.mubr.f32.gmra.mrb[0].mxu0 %v347
    %v430 = vpop.f32.mrb[0].mxu0
    %v431 = vadd.f32 0.0, %v430
    %v432 = vpop.f32.mrb[0].mxu0
    %433 = vdwg.mxu0
    %v434 = vadd.f32 %v300, %v416
    %v435 = vadd.f32 %v301, %v421
    %v436 = vadd.f32 %v302, %v426
    %v437 = vadd.f32 %v303, %v431
    %438 = vst.msk [vmem:[#allocation4] sm:$0xff] %vm295, %v434
    %439 = vst.msk [vmem:[#allocation4 + $0x8] sm:$0xff] %vm295, %v435
    %440 = vst.msk [vmem:[#allocation4 + $0x10] sm:$0xff] %vm295, %v436
    %441 = vst.msk [vmem:[#allocation4 + $0x18] sm:$0xff] %vm295, %v437
    %v442 = vld [vmem:[#allocation5] sm:$0x1]
    %v443 = vsel %vm197, %v58, 0.0
    %v444 = vrot.slane %v443, 4
    %v445 = vadd.f32 %v443, %v444
    %v446 = vrot.slane %v445, 2
    %v447 = vadd.f32 %v445, %v446
    %v448 = vrot.slane %v447, 1
    %v449 = vadd.f32 %v447, %v448
    %v450 = vadd.f32 %v442, %v449
    %vm451 = vcmask 253952
    %452 = vst.msk [vmem:[#allocation5] sm:$0x1] %vm451, %v450
    %v453 = vld [vmem:[#allocation6] sm:$0x1]
    %v454 = vmul.f32 %v58, %v58
    %v455 = vsel %vm197, %v454, 0.0
    %v456 = vrot.slane %v455, 4
    %v457 = vadd.f32 %v455, %v456
    %v458 = vrot.slane %v457, 2
    %v459 = vadd.f32 %v457, %v458
    %v460 = vrot.slane %v459, 1
    %v461 = vadd.f32 %v459, %v460
    %v462 = vadd.f32 %v453, %v461
    %463 = vst.msk [vmem:[#allocation6] sm:$0x1] %vm451, %v462
    // Predicated region
    $region22: #{tpu_custom_call.1} parent=1 // pred_check
      %p464 = pneg %p36
    $region23: #{tpu_custom_call.1} parent=1 // pred_check_branch
      %466 = sbr.rel (%p464) target = $region25
    $region24: #{tpu_custom_call.1} parent=1 // pred_region
      %v467 = vld [vmem:[#allocation3] sm:$0xff]
      %v468 = vld [vmem:[#allocation3 + $0x8] sm:$0xff]
      %v469 = vld [vmem:[#allocation3 + $0x10] sm:$0xff]
      %v470 = vld [vmem:[#allocation3 + $0x18] sm:$0xff]
      %v471 = vrcp.pop 8.0
      %v472 = vmul.f32 %v467, %v471
      %v473 = vmul.f32 %v468, %v471
      %v474 = vmul.f32 %v469, %v471
      %v475 = vmul.f32 %v470, %v471
      %v476 = vld [vmem:[#allocation5] sm:$0x1]
      %v477 = vmul.f32 %v476, %v471
      %v478 = vld [vmem:[#allocation4] sm:$0xff]
      %v479 = vld [vmem:[#allocation4 + $0x8] sm:$0xff]
      %v480 = vld [vmem:[#allocation4 + $0x10] sm:$0xff]
      %v481 = vld [vmem:[#allocation4 + $0x18] sm:$0xff]
      %v482 = vmul.f32 %v472, 8.0
      %v483 = vmul.f32 %v473, 8.0
      %v484 = vmul.f32 %v474, 8.0
      %v485 = vmul.f32 %v475, 8.0
      %v486 = vmul.f32 %v482, %v472
      %v487 = vmul.f32 %v483, %v473
      %v488 = vmul.f32 %v484, %v474
      %v489 = vmul.f32 %v485, %v475
      %v490 = vsub.f32 %v478, %v486
      %v491 = vsub.f32 %v479, %v487
      %v492 = vsub.f32 %v480, %v488
      %v493 = vsub.f32 %v481, %v489
      %v494 = vrcp.pop 7.0
      %v495 = vmul.f32 %v490, %v494
      %v496 = vmul.f32 %v491, %v494
      %v497 = vmul.f32 %v492, %v494
      %v498 = vmul.f32 %v493, %v494
      %v499 = vld [vmem:[#allocation6] sm:$0x1]
      %v500 = vmul.f32 %v477, 8.0
      %v501 = vmul.f32 %v500, %v477
      %v502 = vsub.f32 %v499, %v501
      %v503 = vmul.f32 %v502, %v494
      %v504 = vrsqrt.pop %v495
      %v505 = vrsqrt.pop %v496
      %v506 = vrsqrt.pop %v497
      %v507 = vrsqrt.pop %v498
      %v508 = vrsqrt.pop %v503
      %v509 = vld [vmem:[#allocation2] sm:$0xff]
      %v510 = vld [vmem:[#allocation2 + $0x8] sm:$0xff]
      %v511 = vld [vmem:[#allocation2 + $0x10] sm:$0xff]
      %v512 = vld [vmem:[#allocation2 + $0x18] sm:$0xff]
      %514 = vset.pattern.permute.xlu0 0
      %515 = vperm.xlu0 %514, %v472
      %v516 = vpop.permute.xlu0 %515
      %519 = vset.pattern.permute.xlu0 0
      %520 = vperm.xlu0 %519, %v473
      %v521 = vpop.permute.xlu0 %520
      %524 = vset.pattern.permute.xlu0 0
      %525 = vperm.xlu0 %524, %v474
      %v526 = vpop.permute.xlu0 %525
      %529 = vset.pattern.permute.xlu0 0
      %530 = vperm.xlu0 %529, %v475
      %v531 = vpop.permute.xlu0 %530
      %v534 = vlaneseq
      %v535 = vshrl.u32 %v534, 7
      %v536 = vsub.s32 0, %v535
      %v537 = vrot.slane %v500, %v536
      %v539 = vmul.f32 %v516, %v537
      %v540 = vmul.f32 %v521, %v537
      %v541 = vmul.f32 %v526, %v537
      %v542 = vmul.f32 %v531, %v537
      %v543 = vsub.f32 %v509, %v539
      %v544 = vsub.f32 %v510, %v540
      %v545 = vsub.f32 %v511, %v541
      %v546 = vsub.f32 %v512, %v542
      %v547 = vmul.f32 %v508, 0.125
      %549 = vset.pattern.permute.xlu0 0
      %550 = vperm.xlu0 %549, %v504
      %v551 = vpop.permute.xlu0 %550
      %554 = vset.pattern.permute.xlu0 0
      %555 = vperm.xlu0 %554, %v505
      %v556 = vpop.permute.xlu0 %555
      %559 = vset.pattern.permute.xlu0 0
      %560 = vperm.xlu0 %559, %v506
      %v561 = vpop.permute.xlu0 %560
      %564 = vset.pattern.permute.xlu0 0
      %565 = vperm.xlu0 %564, %v507
      %v566 = vpop.permute.xlu0 %565
      %v569 = vlaneseq
      %v570 = vshrl.u32 %v569, 7
      %v571 = vsub.s32 0, %v570
      %v572 = vrot.slane %v547, %v571
      %v574 = vmul.f32 %v551, %v572
      %v575 = vmul.f32 %v556, %v572
      %v576 = vmul.f32 %v561, %v572
      %v577 = vmul.f32 %v566, %v572
      %v578 = vmul.f32 %v543, %v574
      %v579 = vmul.f32 %v544, %v575
      %v580 = vmul.f32 %v545, %v576
      %v581 = vmul.f32 %v546, %v577
      %v582 = vmul.f32 %v578, %v578
      %v583 = vmul.f32 %v579, %v579
      %v584 = vmul.f32 %v580, %v580
      %v585 = vmul.f32 %v581, %v581
      %v586 = vsel %vm197, %v582, 0.0
      %v587 = vsel %vm197, %v583, 0.0
      %v588 = vadd.f32 %v586, %v587
      %v589 = vsel %vm197, %v584, 0.0
      %v590 = vadd.f32 %v588, %v589
      %v591 = vsel %vm197, %v585, 0.0
      %v592 = vadd.f32 %v590, %v591
      %593 = vadd.xlane.f32.xlu0 %v592
      %v594 = vpop.xlane.xlu0 %593
      %v595 = vrot.slane %v594, 4
      %v596 = vadd.f32 %v594, %v595
      %v597 = vrot.slane %v596, 2
      %v598 = vadd.f32 %v596, %v597
      %v599 = vrot.slane %v598, 1
      %v600 = vadd.f32 %v598, %v599
      %s601 = vtos %v600
      %s602 = smul.f32 %s601, 0.005
      %v603 = vlaneseq
      %v604 = vshrl.u32 %v603, 7
      %v605 = vadd.s32 %v604, 8
      %v606 = vadd.s32 %v604, 16
      %v607 = vadd.s32 %v604, 24
      %v608 = vlaneseq
      %v609 = vand.u32 %v608, 127
      %vm610 = vcmp.eq.s32.totalorder %v604, %v609
      %vm611 = vcmp.eq.s32.totalorder %v605, %v609
      %vm612 = vcmp.eq.s32.totalorder %v606, %v609
      %vm613 = vcmp.eq.s32.totalorder %v607, %v609
      %p614 = scmp.eq.s32.totalorder 0, 0
      %s615 = scalar_select %p614, 1, 0
      %v616 = vstv %s615
      %vm617 = vcmp.eq.s32.totalorder %v616, 1
      %vm618 = vmand %vm610, %vm617
      %vm619 = vmand %vm611, %vm617
      %vm620 = vmand %vm612, %vm617
      %vm621 = vmand %vm613, %vm617
      %v622 = vsub.f32 %v578, 1.0
      %v623 = vsub.f32 %v579, 1.0
      %v624 = vsub.f32 %v580, 1.0
      %v625 = vsub.f32 %v581, 1.0
      %v626 = vmul.f32 %v622, %v622
      %v627 = vmul.f32 %v623, %v623
      %v628 = vmul.f32 %v624, %v624
      %v629 = vmul.f32 %v625, %v625
      %v630 = vmul.f32 %v582, 0.005
      %v631 = vmul.f32 %v583, 0.005
      %v632 = vmul.f32 %v584, 0.005
      %v633 = vmul.f32 %v585, 0.005
      %v634 = vsub.f32 %v626, %v630
      %v635 = vsub.f32 %v627, %v631
      %v636 = vsub.f32 %v628, %v632
      %v637 = vsub.f32 %v629, %v633
      %v638 = vsel %vm618, %v634, 0.0
      %v639 = vsel %vm619, %v635, 0.0
      %v640 = vsel %vm620, %v636, 0.0
      %v641 = vsel %vm621, %v637, 0.0
      %v642 = vsel %vm197, %v638, 0.0
      %v643 = vsel %vm197, %v639, 0.0
      %v644 = vadd.f32 %v642, %v643
      %v645 = vsel %vm197, %v640, 0.0
      %v646 = vadd.f32 %v644, %v645
      %v647 = vsel %vm197, %v641, 0.0
      %v648 = vadd.f32 %v646, %v647
      %649 = vadd.xlane.f32.xlu0 %v648
      %v650 = vpop.xlane.xlu0 %649
      %v651 = vrot.slane %v650, 4
      %v652 = vadd.f32 %v650, %v651
      %v653 = vrot.slane %v652, 2
      %v654 = vadd.f32 %v652, %v653
      %v655 = vrot.slane %v654, 1
      %v656 = vadd.f32 %v654, %v655
      %s657 = vtos %v656
      %s658 = sadd.f32 %s602, %s657
      %vm659 = vcmp.eq.s32.totalorder %v604, 0
      %vm660 = vcmp.eq.s32.totalorder %v609, 0
      %vm661 = vmand %vm659, %vm660
      %v662 = vstv %s658
      %v663 = vsel %vm661, %v662, 0.0
      %664 = vst [vmem:[#allocation12] sm:$0xff] %v663
    $region25: #{tpu_custom_call.1} parent=1 // pred_fallthru
      _
    // Predicated region
    $region26: #{tpu_custom_call.1} parent=1 // pred_check
      _
    $region27: #{tpu_custom_call.1} parent=1 // pred_check_branch
      %666 = sbr.rel (0) target = $region29
    $region28: #{tpu_custom_call.1} parent=1 // pred_region
      %s668 = ssub.s32 128, 128
      %669 = vsyncadd [#allocation9], %s668
      %s671 = sshll.u32 [#allocation12], 4
      %s672 = int_to_ptr.vmem [resolvable:$true] %s671
      %674 = dma.vmem_to_hbm [thread:$0]  %s672, 128, %s2, [#allocation9]
    $region29: #{tpu_custom_call.1} parent=1 // pred_fallthru
      _
    // Predicated region
    $region30: #{tpu_custom_call.1} parent=1 // pred_check
      _
    $region31: #{tpu_custom_call.1} parent=1 // pred_check_branch
      %676 = sbr.rel (0) target = $region33
    $region32: #{tpu_custom_call.1} parent=1 // pred_region
      %677 = dma.done [#allocation9], 128
    $region33: #{tpu_custom_call.1} parent=1 // pred_fallthru
      _
    %678 = vsyncpa [#allocation8], 1
    %679 = vsyncpa [#allocation11], 1
    %680 = vsyncpa [#allocation9], 1

</llo_original>
